<compile_context>
chip_gen: v7x
topology: tpu7x:2x2x1
jax: 0.10.0
libtpu: 0.0.40
codegen_flags: <defaults>
</compile_context>

<pallas_src>
import jax
import jax.numpy as jnp
from jax.experimental import pallas as pl
from jax.experimental.pallas import tpu as pltpu


def _homoscedastic_kernel(x_ref, scale_ref, z_ref):
    # z = x + scale ; scale = exp(0.5*logvar_z) * eps is shared across rows.
    z_ref[...] = x_ref[...] + scale_ref[...]


def _round_up(x, m):
    return ((x + m - 1) // m) * m


def _tpu_config():
    """Generation-aware constants.

    Returns (num_tensorcores, target_tile_bytes, vmem_budget_bytes,
             vmem_limit_bytes).
    """
    kind = ""
    try:
        kind = jax.devices()[0].device_kind.lower()
    except Exception:
        pass
    if "v7" in kind or "tpu7" in kind:
        # v7x: 2 TCs/chip, 64 MiB physical (32 MiB scoped) VMEM per TC.
        return 2, 8 << 20, 28 << 20, 32 << 20
    if "v6" in kind:
        # v6e: 1 TC/chip, 128 MiB VMEM -> bigger tiles, fewer grid steps.
        return 1, 12 << 20, 48 << 20, 64 << 20
    if "v5" in kind:
        # v5e: 1 TC/chip, 128 MiB VMEM; scoped default is only 16 MiB, so the
        # explicit vmem_limit_bytes is required.
        return 1, 12 << 20, 48 << 20, 64 << 20
    # Unknown (v4, interpret mode, ...): conservative defaults, assume 2 TCs.
    return 2, 6 << 20, 24 << 20, 32 << 20


def _choose_blocks(B, L, dtype_bytes, sub, target_tile_bytes, vmem_budget_bytes,
                   num_cores):
    """Pick (block_b, block_l). Pipeline holds ~4 tiles (x and z, each
    double-buffered) plus a tiny shared scale row."""
    tile_budget = max(sub * 128 * dtype_bytes,
                      min(target_tile_bytes, vmem_budget_bytes // 4))

    # --- L (lane) tiling: only when even a minimal (sub, L) tile overflows ---
    if L > 128 and sub * L * dtype_bytes > tile_budget:
        block_l = max(128, (tile_budget // (sub * dtype_bytes)) // 128 * 128)
        block_l = min(block_l, L)
    else:
        block_l = L                      # full-extent lane block (no L padding)

    # --- B (sublane) tiling ---
    rows_fit = max(1, tile_budget // (block_l * dtype_bytes))
    if rows_fit >= B:
        if num_cores >= 2 and B >= 2 * sub:
            # Split into 2 even-ish steps so both TensorCores get work.
            block_b = _round_up(pl.cdiv(B, 2), sub)
        else:
            block_b = B                  # single grid step, full-extent block
    else:
        block_b = max(sub, (rows_fit // sub) * sub)
        if num_cores >= 2:
            nb = pl.cdiv(B, block_b)
            if nb > 1 and nb % 2 == 1:
                # Even step count keeps the 2 TCs balanced on the parallel axis.
                block_b = max(sub, _round_up(pl.cdiv(B, nb + 1), sub))
    return block_b, block_l


def homoscedastic_gaussian_forward(x, logvar_z, eps, *, block_b=None,
                                   block_l=None):
    """Pallas implementation of HomoscedasticGaussian.forward (training mode).

    x        : (B, L) inputs (== mu)
    logvar_z : (L,)   learned homoscedastic log-variance
    eps      : (L,)   standard-normal noise, shared across the batch
    returns  : (z, (x, logvar_z)) mirroring the PyTorch return structure.
    """
    B, L = x.shape
    dtype = x.dtype
    dtype_bytes = jnp.dtype(dtype).itemsize
    sub = max(8, 32 // dtype_bytes)      # sublane multiple: f32=8, bf16=16, i8=32

    # Fold exp(0.5*logvar)*eps into one shared (1, L) scale row.  Do the exp in
    # f32 regardless of x dtype, then cast (precision fix from review).
    scale = (jnp.exp(0.5 * logvar_z.astype(jnp.float32))
             * eps.astype(jnp.float32)).astype(dtype)
    scale_2d = scale.reshape(1, L)

    num_cores, target_tile_bytes, vmem_budget_bytes, vmem_limit_bytes = _tpu_config()
    auto_b, auto_l = _choose_blocks(B, L, dtype_bytes, sub, target_tile_bytes,
                                    vmem_budget_bytes, num_cores)
    if block_b is None:
        block_b = auto_b
    if block_l is None:
        block_l = auto_l

    nb = pl.cdiv(B, block_b)             # partial last block handled by Pallas
    nl = pl.cdiv(L, block_l)

    cost = pl.CostEstimate(
        flops=B * L,
        transcendentals=0,
        bytes_accessed=2 * B * L * dtype_bytes + L * dtype_bytes,
    )

    z = pl.pallas_call(
        _homoscedastic_kernel,
        out_shape=jax.ShapeDtypeStruct((B, L), dtype),
        grid_spec=pltpu.PrefetchScalarGridSpec(
            num_scalar_prefetch=0,
            grid=(nb, nl),
            in_specs=[
                pl.BlockSpec((block_b, block_l), lambda i, j: (i, j)),  # x tile
                pl.BlockSpec((1, block_l), lambda i, j: (0, j)),        # shared scale
            ],
            out_specs=pl.BlockSpec((block_b, block_l), lambda i, j: (i, j)),
        ),
        compiler_params=pltpu.CompilerParams(
            dimension_semantics=("parallel", "parallel"),
            vmem_limit_bytes=vmem_limit_bytes,
        ),
        cost_estimate=cost,
    )(x, scale_2d)

    return z, (x, logvar_z)


if __name__ == "__main__":
    # Small shapes consistent with the module: batch=8, latent_size=128.
    B, L = 8, 128
    key = jax.random.PRNGKey(0)
    k_x, k_lv, k_eps = jax.random.split(key, 3)

    x = jax.random.normal(k_x, (B, L), dtype=jnp.float32)

    # PyTorch calls kaiming_normal_ on the 1-D parameter; emulate Kaiming-style
    # scaling: N(0, sqrt(2 / fan)).
    logvar_z = jax.random.normal(k_lv, (L,), dtype=jnp.float32) * jnp.sqrt(2.0 / L)

    # eps ~ N(0,1) with the shape of logvar (a single vector shared across the
    # batch), matching torch.randn_like(std) where std is 1-D.
    eps = jax.random.normal(k_eps, (L,), dtype=jnp.float32)

    z, (mu_out, logvar_out) = homoscedastic_gaussian_forward(x, logvar_z, eps)
    jax.block_until_ready(z)

    z_ref = x + jnp.exp(0.5 * logvar_z)[None, :] * eps[None, :]
    assert jnp.allclose(z, z_ref, atol=1e-5, rtol=1e-5)
    assert mu_out.shape == (B, L) and logvar_out.shape == (L,)

    # Ragged batch (partial last block inside the pallas_call; no wrapper
    # pad / slice, no extra HBM round trips).
    B2 = 1000
    x2 = jax.random.normal(jax.random.PRNGKey(1), (B2, L), dtype=jnp.float32)
    z2, _ = homoscedastic_gaussian_forward(x2, logvar_z, eps)
    jax.block_until_ready(z2)
    z2_ref = x2 + jnp.exp(0.5 * logvar_z)[None, :] * eps[None, :]
    assert jnp.allclose(z2, z2_ref, atol=1e-5, rtol=1e-5)

    # Latent dim that is NOT a multiple of 128: full-extent lane block, no L
    # padding in the wrapper.
    L3, B3 = 96, 24
    lv3 = jax.random.normal(jax.random.PRNGKey(2), (L3,), jnp.float32) * jnp.sqrt(2.0 / L3)
    eps3 = jax.random.normal(jax.random.PRNGKey(3), (L3,), jnp.float32)
    x3 = jax.random.normal(jax.random.PRNGKey(4), (B3, L3), dtype=jnp.float32)
    z3, _ = homoscedastic_gaussian_forward(x3, lv3, eps3)
    jax.block_until_ready(z3)
    z3_ref = x3 + jnp.exp(0.5 * lv3)[None, :] * eps3[None, :]
    assert jnp.allclose(z3, z3_ref, atol=1e-5, rtol=1e-5)

    print("KERNEL_OK")
</pallas_src>

<mosaic_0001>
module attributes {stable_mosaic.version = 11 : i64} {
  func.func @_homoscedastic_kernel(%arg0: i32, %arg1: i32, %arg2: memref<8x128xf32, #tpu.memory_space<vmem>>, %arg3: memref<1x128xf32, #tpu.memory_space<vmem>>, %arg4: memref<8x128xf32, #tpu.memory_space<vmem>>) attributes {dimension_semantics = [#tpu.dimension_semantics<parallel>, #tpu.dimension_semantics<parallel>], iteration_bounds = array<i64: 1, 1>, scalar_prefetch = 0 : i64, scratch_operands = 0 : i64, tpu.core_type = #tpu.core_type<tc>, window_params = [{transform_indices = @transform_0, window_bounds = array<i64: 8, 128>}, {transform_indices = @transform_1, window_bounds = array<i64: 1, 128>}, {transform_indices = @transform_2, window_bounds = array<i64: 8, 128>}]} {
    %c0 = arith.constant 0 : index
    %c0_0 = arith.constant 0 : index
    %0 = vector.load %arg2[%c0, %c0_0] : memref<8x128xf32, #tpu.memory_space<vmem>>, vector<8x128xf32>
    %c0_1 = arith.constant 0 : index
    %c0_2 = arith.constant 0 : index
    %1 = vector.load %arg3[%c0_1, %c0_2] : memref<1x128xf32, #tpu.memory_space<vmem>>, vector<1x128xf32>
    %2 = vector.broadcast %1 : vector<1x128xf32> to vector<8x128xf32>
    %3 = arith.addf %0, %2 : vector<8x128xf32>
    %c0_3 = arith.constant 0 : index
    %c0_4 = arith.constant 0 : index
    %4 = vector.load %arg4[%c0_3, %c0_4] : memref<8x128xf32, #tpu.memory_space<vmem>>, vector<8x128xf32>
    tpu.vector_store %arg4[%c0_3, %c0_4], %3 {strides = array<i32>} : memref<8x128xf32, #tpu.memory_space<vmem>>, vector<8x128xf32>,
    return
  }
  func.func @transform_0(%arg0: i32, %arg1: i32) -> (i32, i32) {
    %c0_i32 = arith.constant 0 : i32
    return %arg0, %arg1 : i32, i32
  }
  func.func @transform_1(%arg0: i32, %arg1: i32) -> (i32, i32) {
    %c0_i32 = arith.constant 0 : i32
    %c0_i32_0 = arith.constant 0 : i32
    return %c0_i32, %arg1 : i32, i32
  }
  func.func @transform_2(%arg0: i32, %arg1: i32) -> (i32, i32) {
    %c0_i32 = arith.constant 0 : i32
    return %arg0, %arg1 : i32, i32
  }
}

</mosaic_0001>

<llo_original>
// kernel: tpu_custom_call.1
$region0: #{tpu_custom_call.1}
  #allocation0 [shape = 'u32[]', space=smem, size = 0x4, offset = 0x4, fixed_abs, tag = 'smem constant byte address 0x4 - core index']
  #allocation1 [shape = 'u32[144,128]{1,0:T(1,128)}', space=vmem, size = 0x12000, scoped, tag = 'internal scratch']
  %s0 = inlined_call_operand.hbm [shape: f32[8,128], index: 0, kind: input, shape index: {}]
  %s1 = inlined_call_operand.vmem [shape: f32[1,128], index: 1, kind: input, shape index: {}]
  %s2 = inlined_call_operand.hbm [shape: f32[8,128], index: 2, kind: output, shape index: {}]
  %s3 = sld [smem:[#allocation0]]
  $region22: #{tpu_custom_call.1} parent=0
    _
  %s5 = ssub.s32 1, %s3
  %s6 = scalar_select 0, %s5, %s3
  $region1: #{tpu_custom_call.1} parent=0
    #allocation2 [shape = 'u8[4096]{0}', space=vmem, size = 0x1000, scoped, tag = 'input window, operand 0, single buffered']
    #allocation3 [shape = 's32[1]{0}', space=sflag, size = 0x4, scoped, tag = 'scoped memory for tpu_custom_call.1']
    #allocation4 [shape = 's32[1]{0}', space=sflag, size = 0x4, scoped, tag = 'scoped memory for tpu_custom_call.1']
    #allocation5 [shape = 'u8[4096]{0}', space=vmem, size = 0x1000, scoped, tag = 'output window, operand 0, single buffered']
    %7 = vsyncpa [#allocation3], 0
    %8 = vsyncpa [#allocation4], 0
    // Predicated region
    $region2: #{tpu_custom_call.1} parent=1 // pred_check
      _
    $region3: #{tpu_custom_call.1} parent=1 // pred_check_branch
      %10 = sbr.rel (0) target = $region5
    $region4: #{tpu_custom_call.1} parent=1 // pred_region
      %s12 = ssub.s32 128, 128
      %13 = vsyncadd [#allocation3], %s12
      %s15 = sshll.u32 [#allocation2], 4
      %s16 = int_to_ptr.vmem [resolvable:$true] %s15
      %18 = dma.hbm_to_vmem [thread:$0]  %s0, 128, %s16, [#allocation3]
    $region5: #{tpu_custom_call.1} parent=1 // pred_fallthru
      _
    // Predicated region
    $region6: #{tpu_custom_call.1} parent=1 // pred_check
      _
    $region7: #{tpu_custom_call.1} parent=1 // pred_check_branch
      %20 = sbr.rel (0) target = $region9
    $region8: #{tpu_custom_call.1} parent=1 // pred_region
      _
    $region9: #{tpu_custom_call.1} parent=1 // pred_fallthru
      _
    // Predicated region
    $region10: #{tpu_custom_call.1} parent=1 // pred_check
      _
    $region11: #{tpu_custom_call.1} parent=1 // pred_check_branch
      %22 = sbr.rel (0) target = $region13
    $region12: #{tpu_custom_call.1} parent=1 // pred_region
      %23 = dma.done [#allocation3], 128
    $region13: #{tpu_custom_call.1} parent=1 // pred_fallthru
      _
    %v24 = vld [vmem:[#allocation2] sm:$0xff]
    %v25 = vld [vmem:[%s1] sm:$0x1]
    %v27 = vlaneseq
    %v28 = vshrl.u32 %v27, 7
    %v29 = vsub.s32 0, %v28
    %v30 = vrot.slane %v25, %v29
    %v32 = vadd.f32 %v24, %v30
    %33 = vst [vmem:[#allocation5] sm:$0xff] %v32
    // Predicated region
    $region14: #{tpu_custom_call.1} parent=1 // pred_check
      _
    $region15: #{tpu_custom_call.1} parent=1 // pred_check_branch
      %35 = sbr.rel (0) target = $region17
    $region16: #{tpu_custom_call.1} parent=1 // pred_region
      %s37 = ssub.s32 128, 128
      %38 = vsyncadd [#allocation4], %s37
      %s40 = sshll.u32 [#allocation5], 4
      %s41 = int_to_ptr.vmem [resolvable:$true] %s40
      %43 = dma.vmem_to_hbm [thread:$0]  %s41, 128, %s2, [#allocation4]
    $region17: #{tpu_custom_call.1} parent=1 // pred_fallthru
      _
    // Predicated region
    $region18: #{tpu_custom_call.1} parent=1 // pred_check
      _
    $region19: #{tpu_custom_call.1} parent=1 // pred_check_branch
      %45 = sbr.rel (0) target = $region21
    $region20: #{tpu_custom_call.1} parent=1 // pred_region
      %46 = dma.done [#allocation4], 128
    $region21: #{tpu_custom_call.1} parent=1 // pred_fallthru
      _
    %47 = vsyncpa [#allocation3], 1
    %48 = vsyncpa [#allocation4], 1

</llo_original>
